<compile_context>
chip_gen: v5e
topology: v5e:2x2
jax: 0.10.0
libtpu: 0.0.40
codegen_flags: <defaults>
</compile_context>

<pallas_src>
import math
import random

import numpy as np
import jax
import jax.numpy as jnp
from jax.experimental import pallas as pl
from jax.experimental.pallas import tpu as pltpu


# ----------------------------------------------------------------------------
# Primary kernel: zero-DMA pass-through (output HBM buffer aliases x).
# ----------------------------------------------------------------------------
def _touch_kernel(x_ref, o_ref):
    # No data movement: the output buffer is aliased to x, so its bytes are
    # already x.  touch() just pins read/write deps so the call isn't elided.
    pltpu.touch(x_ref)
    pltpu.touch(o_ref)


def _herd_touch_call(x):
    return pl.pallas_call(
        _touch_kernel,
        out_shape=jax.ShapeDtypeStruct(x.shape, x.dtype),
        in_specs=[pl.BlockSpec(memory_space=pl.ANY)],
        out_specs=pl.BlockSpec(memory_space=pl.ANY),
        input_output_aliases={0: 0},  # output buffer == x's buffer
        compiler_params=pltpu.CompilerParams(has_side_effects=True),
        # No cost_estimate: this op touches ~0 bytes; don't advertise a
        # phantom 2*N-byte memory op to XLA's scheduler.
    )(x)


_touch_jit_donated = jax.jit(_herd_touch_call, donate_argnums=(0,))
_touch_jit = jax.jit(_herd_touch_call)


# ----------------------------------------------------------------------------
# Fallback kernel: tiled lane-dense VMEM copy (previously verified variant,
# with v7x-safe block / VMEM sizing).  Only used if the zero-DMA path fails.
# ----------------------------------------------------------------------------
def _copy_kernel(x_ref, o_ref):
    o_ref[...] = x_ref[...]


def _lane_dense_2d(x):
    """Reshape to (rows, C) with C a multiple of 128 when possible (unmasked
    lane-dense stores); otherwise fall back to the last dim."""
    flat = x.reshape(-1)
    total = flat.shape[0]
    for cols in (1024, 512, 256, 128):
        if total % cols == 0:
            return flat.reshape(total // cols, cols)
    if x.ndim >= 2:
        return x.reshape(-1, x.shape[-1])
    return flat.reshape(1, total)


def _pick_block_rows(n_rows, n_cols, itemsize, max_block_bytes):
    """Largest sublane-aligned row tile with one block <= max_block_bytes."""
    packing = max(1, 4 // max(1, itemsize))   # 8 sublanes f32, 16 bf16, 32 i8
    sublane = 8 * packing
    rows_fit = max(sublane, max_block_bytes // max(1, n_cols * itemsize))
    if rows_fit >= n_rows:
        return n_rows  # full array extent is always a legal block dim
    return max(sublane, (rows_fit // sublane) * sublane)


def _herd_copy_call(x, *, max_block_bytes=4 * 1024 * 1024):
    orig_shape = x.shape
    x2 = _lane_dense_2d(x)
    rows, cols = x2.shape
    itemsize = x2.dtype.itemsize

    block_rows = _pick_block_rows(rows, cols, itemsize, max_block_bytes)
    grid0 = pl.cdiv(rows, block_rows)
    block_bytes = block_rows * cols * itemsize
    # Double-buffered in + out blocks + margin; never request all of v7x VMEM.
    vmem_limit = min(32 * 1024 * 1024,
                     max(16 * 1024 * 1024, 4 * block_bytes + 4 * 1024 * 1024))

    out = pl.pallas_call(
        _copy_kernel,
        out_shape=jax.ShapeDtypeStruct((rows, cols), x2.dtype),
        grid=(grid0,),
        in_specs=[pl.BlockSpec((block_rows, cols), lambda i: (i, 0))],
        out_specs=pl.BlockSpec((block_rows, cols), lambda i: (i, 0)),
        compiler_params=pltpu.CompilerParams(
            dimension_semantics=("parallel",) if grid0 > 1 else ("arbitrary",),
            vmem_limit_bytes=vmem_limit,
        ),
        cost_estimate=pl.CostEstimate(
            flops=0, transcendentals=0,
            bytes_accessed=2 * rows * cols * itemsize),
    )(x2)
    return out.reshape(orig_shape)


_copy_jit_donated = jax.jit(_herd_copy_call, donate_argnums=(0,))
_copy_jit = jax.jit(_herd_copy_call)


# ----------------------------------------------------------------------------
# Forward wrapper.
# ----------------------------------------------------------------------------
_SMALL_BYPASS_BYTES = 256 * 1024
_touch_kernel_ok = True  # flips to False if the zero-DMA variant fails to lower


def herd_forward(x, *, donate=True, force_kernel=False):
    """Identity pass-through for Herd.forward.

    TODO(synk): torch Herd.forward is `pass` (returns None); we return x
    unchanged (documented semantic deviation) instead of faking compute.
    Callers using donate=True must not reuse x afterwards.
    """
    global _touch_kernel_ok

    if not force_kernel and x.size * x.dtype.itemsize < _SMALL_BYPASS_BYTES:
        # Tiny inputs: launch + pipeline overhead dominates; pure identity.
        return x

    if _touch_kernel_ok:
        try:
            fn = _touch_jit_donated if donate else _touch_jit
            return fn(x)
        except Exception:
            # Zero-DMA variant failed to lower on this backend; use the
            # known-good tiled copy instead.
            _touch_kernel_ok = False

    return (_copy_jit_donated if donate else _copy_jit)(x)


class HerdPallas:
    """JAX/Pallas mirror of the PyTorch `Herd` module."""

    def __init__(self, herd_size=32, train_size=200,
                 input_size=28 * 28 * 1, output_size=10, seed=0):
        rng = random.Random(seed)
        ls = int(np.log(train_size) * 26)
        if ls < 120:
            ls = 120
        # The torch module never registers these sub-models and never uses
        # them in forward, so we only record layout metadata (no dead weights).
        depths = sorted(rng.randint(2, 6) for _ in range(herd_size))
        self.model_layout = [
            (input_size, math.floor(rng.gauss(ls, ls // 16)), depth, output_size)
            for depth in depths
        ]

    def __call__(self, x, *, donate=True, force_kernel=False):
        return herd_forward(x, donate=donate, force_kernel=force_kernel)


if __name__ == "__main__":
    key = jax.random.PRNGKey(0)
    batch, in_features = 8, 28 * 28 * 1  # matches Herd's default input_size=784
    x = jax.random.normal(key, (batch, in_features), dtype=jnp.float32)

    # Host copy for verification (x's device buffer is donated to the kernel).
    expected = np.asarray(x)

    herd = HerdPallas(herd_size=4, train_size=200,
                      input_size=in_features, output_size=10, seed=0)
    # force_kernel=True so the Pallas kernel actually compiles and runs once
    # (the small-input bypass would otherwise skip it for this tiny demo).
    y = herd(x, force_kernel=True)
    jax.block_until_ready(y)

    assert y.shape == expected.shape and y.dtype == expected.dtype
    assert np.allclose(np.asarray(y), expected), "Herd forward must pass x through"
    print("KERNEL_OK")
</pallas_src>

<mosaic_0001>
module attributes {stable_mosaic.version = 11 : i64} {
  func.func @_touch_kernel(%arg0: memref<8x784xf32, #tpu.memory_space<any>>, %arg1: memref<8x784xf32, #tpu.memory_space<any>>) attributes {dimension_semantics = [], scalar_prefetch = 0 : i64, scratch_operands = 0 : i64, tpu.core_type = #tpu.core_type<tc>} {
    return
  }
}

module attributes {stable_mosaic.version = 11 : i64} {
  func.func @_copy_kernel(%arg0: i32, %arg1: memref<49x128xf32, #tpu.memory_space<vmem>>, %arg2: memref<49x128xf32, #tpu.memory_space<vmem>>) attributes {dimension_semantics = [#tpu.dimension_semantics<arbitrary>], iteration_bounds = array<i64: 1>, scalar_prefetch = 0 : i64, scratch_operands = 0 : i64, tpu.core_type = #tpu.core_type<tc>, window_params = [{transform_indices = @transform_0, window_bounds = array<i64: 49, 128>}, {transform_indices = @transform_1, window_bounds = array<i64: 49, 128>}]} {
    %c0 = arith.constant 0 : index
    %c0_0 = arith.constant 0 : index
    %0 = vector.load %arg1[%c0, %c0_0] : memref<49x128xf32, #tpu.memory_space<vmem>>, vector<49x128xf32>
    %c0_1 = arith.constant 0 : index
    %c0_2 = arith.constant 0 : index
    %1 = vector.load %arg2[%c0_1, %c0_2] : memref<49x128xf32, #tpu.memory_space<vmem>>, vector<49x128xf32>
    tpu.vector_store %arg2[%c0_1, %c0_2], %0 {strides = array<i32>} : memref<49x128xf32, #tpu.memory_space<vmem>>, vector<49x128xf32>,
    return
  }
  func.func @transform_0(%arg0: i32) -> (i32, i32) {
    %c0_i32 = arith.constant 0 : i32
    %c0_i32_0 = arith.constant 0 : i32
    return %arg0, %c0_i32 : i32, i32
  }
  func.func @transform_1(%arg0: i32) -> (i32, i32) {
    %c0_i32 = arith.constant 0 : i32
    %c0_i32_0 = arith.constant 0 : i32
    return %arg0, %c0_i32 : i32, i32
  }
}

</mosaic_0001>

<llo_original>
// kernel: _herd_touch_call.1
$region0: #{_herd_touch_call.1}
  #allocation0 [shape = 'u32[]', space=smem, size = 0x4, offset = 0x4, fixed_abs, tag = 'smem constant byte address 0x4 - core index']
  #allocation1 [shape = 'u32[72,128]{1,0:T(1,128)}', space=vmem, size = 0x9000, scoped, tag = 'internal scratch']
  %s0 = inlined_call_operand.hbm [shape: f32[8,784], index: 0, kind: input, shape index: {}, may-alias: {0,1}]
  %s1 = inlined_call_operand.hbm [shape: f32[8,784], index: 1, kind: output, shape index: {}, may-alias: {0,1}]
  %s2 = sld [smem:[#allocation0]]
  $region2: #{_herd_touch_call.1} parent=0
    _
  %s4 = ssub.s32 1, %s2
  %s5 = scalar_select 0, %s4, %s2

// kernel: _herd_copy_call.1
$region0: #{_herd_copy_call.1}
  #allocation0 [shape = 'u32[]', space=smem, size = 0x4, offset = 0x4, fixed_abs, tag = 'smem constant byte address 0x4 - core index']
  #allocation1 [shape = 'u32[72,128]{1,0:T(1,128)}', space=vmem, size = 0x9000, scoped, tag = 'internal scratch']
  %s0 = inlined_call_operand.vmem [shape: f32[49,128], index: 0, kind: input, shape index: {}]
  %s1 = inlined_call_operand.vmem [shape: f32[49,128], index: 1, kind: output, shape index: {}]
  %s2 = sld [smem:[#allocation0]]
  $region14: #{_herd_copy_call.1} parent=0
    _
  %s4 = ssub.s32 1, %s2
  %s5 = scalar_select 0, %s4, %s2
  // Predicated region
  $region2: #{_herd_copy_call.1} parent=0 // pred_check
    _
  $region3: #{_herd_copy_call.1} parent=0 // pred_check_branch
    %7 = sbr.rel (0) target = $region5
  $region4: #{_herd_copy_call.1} parent=0 // pred_region
    _
  $region5: #{_herd_copy_call.1} parent=0 // pred_fallthru
    _
  %v8 = vld [vmem:[%s0] sm:$0xff]
  %v9 = vld [vmem:[%s0 + $0x8] sm:$0xff]
  %v10 = vld [vmem:[%s0 + $0x10] sm:$0xff]
  %v11 = vld [vmem:[%s0 + $0x18] sm:$0xff]
  %v12 = vld [vmem:[%s0 + $0x20] sm:$0xff]
  %v13 = vld [vmem:[%s0 + $0x28] sm:$0xff]
  %v14 = vld [vmem:[%s0 + $0x30] sm:$0x1]
  %15 = vst [vmem:[%s1] sm:$0xff] %v8
  %16 = vst [vmem:[%s1 + $0x8] sm:$0xff] %v9
  %17 = vst [vmem:[%s1 + $0x10] sm:$0xff] %v10
  %18 = vst [vmem:[%s1 + $0x18] sm:$0xff] %v11
  %19 = vst [vmem:[%s1 + $0x20] sm:$0xff] %v12
  %20 = vst [vmem:[%s1 + $0x28] sm:$0xff] %v13
  %21 = vst [vmem:[%s1 + $0x30] sm:$0x1] %v14
  // Predicated region
  $region6: #{_herd_copy_call.1} parent=0 // pred_check
    _
  $region7: #{_herd_copy_call.1} parent=0 // pred_check_branch
    %23 = sbr.rel (0) target = $region9
  $region8: #{_herd_copy_call.1} parent=0 // pred_region
    _
  $region9: #{_herd_copy_call.1} parent=0 // pred_fallthru
    _
  // Predicated region
  $region10: #{_herd_copy_call.1} parent=0 // pred_check
    _
  $region11: #{_herd_copy_call.1} parent=0 // pred_check_branch
    %25 = sbr.rel (0) target = $region13
  $region12: #{_herd_copy_call.1} parent=0 // pred_region
    _
  $region13: #{_herd_copy_call.1} parent=0 // pred_fallthru
    _

</llo_original>
